<compile_context>
chip_gen: v5e
topology: v5e:2x2
jax: 0.10.0
libtpu: 0.0.40
codegen_flags: <defaults>
</compile_context>

<pallas_src>
import jax
import jax.numpy as jnp
from jax.experimental import pallas as pl
from jax.experimental.pallas import tpu as pltpu


# ----------------------------- kernel bodies -----------------------------

def _inner_dot(x, w1):
    # x: (bt, d_out), w1: (C*m, d_out) -> (bt, C*m); f32 accumulation (trans_b).
    return jax.lax.dot_general(
        x, w1, dimension_numbers=(((1,), (1,)), ((), ())),
        preferred_element_type=jnp.float32)


def _outer_dot(inner, w2):
    # inner: (bt, C*m), w2: (C*m, d_in) -> (bt, d_in); f32 accumulation.
    return jax.lax.dot_general(
        inner, w2, dimension_numbers=(((1,), (0,)), ((), ())),
        preferred_element_type=jnp.float32)


def _tl_kernel_nomask(x_ref, w1_ref, w2_ref, o_ref):
    inner = _inner_dot(x_ref[...], w1_ref[...])                  # (bt, C*m) f32
    out = _outer_dot(inner.astype(w2_ref.dtype), w2_ref[...])    # (bt, d_in) f32
    o_ref[...] = out.astype(o_ref.dtype)


def _tl_kernel_masked(x_ref, w1_ref, w2_ref, mask_ref, o_ref):
    bt = x_ref.shape[0]
    cm = w1_ref.shape[0]
    C = mask_ref.shape[1]
    m = cm // C
    inner = _inner_dot(x_ref[...], w1_ref[...])                  # (bt, C*m) f32
    mask = mask_ref[...].astype(jnp.float32)                     # (bt, C) f32 (0/1)
    mexp = jnp.broadcast_to(mask[:, :, None], (bt, C, m)).reshape(bt, cm)
    inner = inner * mexp
    out = _outer_dot(inner.astype(w2_ref.dtype), w2_ref[...])    # (bt, d_in) f32
    o_ref[...] = out.astype(o_ref.dtype)


# ----------------------------- wrapper -----------------------------

def _vmem_limit_bytes():
    cap = None
    try:
        info_fn = getattr(pltpu, "get_tpu_info", None)
        if info_fn is not None:
            cap = int(info_fn().vmem_capacity_bytes)
    except Exception:
        cap = None
    if not cap:
        cap = 64 * 1024 * 1024  # conservative (v7x-sized) fallback
    # ~96-100 MiB on 128 MiB parts (v5e/v6e), ~48 MiB on 64 MiB parts (v7x).
    return min(100 * 1024 * 1024, int(cap * 0.75))


def _pick_batch_tile(batch, d_in, d_out, C, m, w_itemsize, has_mask, vmem_limit):
    cm = C * m
    weight_bytes = 2 * cm * (d_in + d_out) * w_itemsize          # double-buffered W1/W2

    def fits(bt):
        act = 2 * bt * (d_out + d_in) * w_itemsize               # x / out tiles (2-buffered)
        msk = (2 * bt * C * 4) if has_mask else 0                 # f32 mask tiles
        live = bt * cm * 4 * (2 if has_mask else 1)               # f32 inner (+ expanded mask)
        return weight_bytes + act + msk + live <= int(vmem_limit * 0.8)

    for bt in (1024, 512, 256, 128):
        if batch % bt == 0 and fits(bt):
            return bt
    return batch  # single full-batch tile


def transposed_linear_forward(x, original_A, original_B, topk_mask=None,
                              batch_tile=None):
    """Forward pass of TransposedLinearComponent.

    x:           (batch, n_inst, d_out)
    original_A:  (n_inst, C, d_in, m)
    original_B:  (n_inst, C, m, d_out)
    topk_mask:   optional (batch, n_inst, C)
    Returns      (batch, n_inst, d_in) in x.dtype.

    The MXU operand dtype follows the weights' dtype: store/pass original_A/B
    in bf16 for bf16 MXU rate (accumulation is always f32).
    """
    n_inst, C, d_in, m = original_A.shape
    d_out = original_B.shape[-1]
    batch = x.shape[0]
    out_dtype = x.dtype
    w_dtype = original_A.dtype
    cm = C * m

    vmem_limit = _vmem_limit_bytes()
    if batch_tile is None:
        batch_tile = _pick_batch_tile(batch, d_in, d_out, C, m,
                                      jnp.dtype(w_dtype).itemsize,
                                      topk_mask is not None, vmem_limit)
    assert batch % batch_tile == 0, "batch must divide evenly into batch_tile"
    num_bt = batch // batch_tile

    # Weight layout (amortizable; weights could be stored this way):
    #   W1[i] = original_B[i].reshape(C*m, d_out)                   (free reshape)
    #   W2[i] = original_A[i].swapaxes(-1, -2).reshape(C*m, d_in)   (one transpose pass)
    w1 = original_B.reshape(n_inst, cm, d_out)
    w2 = jnp.transpose(original_A, (0, 1, 3, 2)).reshape(n_inst, cm, d_in)

    # Activation layout plumbing: instance-major for the kernel.
    # TODO(synk): keep activations (i, b, d) end-to-end in the surrounding model
    # to drop these two HBM passes (and the output transpose below).
    x_c = x.astype(w_dtype) if x.dtype != w_dtype else x
    x_ibd = jnp.transpose(x_c, (1, 0, 2))                          # (i, b, d_out)

    grid = (n_inst, num_bt)          # instance = slow axis -> weight blocks stay resident
    x_spec = pl.BlockSpec((None, batch_tile, d_out), lambda i, b: (i, b, 0))
    w1_spec = pl.BlockSpec((None, cm, d_out), lambda i, b: (i, 0, 0))
    w2_spec = pl.BlockSpec((None, cm, d_in), lambda i, b: (i, 0, 0))
    out_spec = pl.BlockSpec((None, batch_tile, d_in), lambda i, b: (i, b, 0))

    in_specs = [x_spec, w1_spec, w2_spec]
    args = [x_ibd, w1, w2]

    if topk_mask is None:
        kernel = _tl_kernel_nomask
    else:
        kernel = _tl_kernel_masked
        # (b, i, C) -> (i, b, C): batch in sublanes, C in lanes; keep f32
        # (v5e VPU has no bf16; mask is 0/1 so f32 is exact anyway).
        mask_ibc = jnp.transpose(topk_mask, (1, 0, 2)).astype(jnp.float32)
        in_specs.append(
            pl.BlockSpec((None, batch_tile, C), lambda i, b: (i, b, 0)))
        args.append(mask_ibc)

    out_ibk = pl.pallas_call(
        kernel,
        out_shape=jax.ShapeDtypeStruct((n_inst, batch, d_in), out_dtype),
        grid_spec=pltpu.PrefetchScalarGridSpec(
            num_scalar_prefetch=0,
            grid=grid,
            in_specs=in_specs,
            out_specs=out_spec,
        ),
        compiler_params=pltpu.CompilerParams(
            dimension_semantics=("parallel", "parallel"),
            vmem_limit_bytes=vmem_limit),
    )(*args)

    return jnp.transpose(out_ibk, (1, 0, 2))                       # (b, i, d_in)


# ----------------------------- reference & test -----------------------------

def _reference_forward(x, original_A, original_B, topk_mask=None):
    A = jnp.transpose(original_B, (0, 1, 3, 2))
    B = jnp.transpose(original_A, (0, 1, 3, 2))
    inner = jnp.einsum('bid,icdm->bicm', x, A)
    if topk_mask is not None:
        inner = inner * topk_mask[..., None]
    comp = jnp.einsum('bicm,icmk->bick', inner, B)
    return comp.sum(axis=2)


if __name__ == "__main__":
    key = jax.random.PRNGKey(0)
    k1, k2, k3, k4 = jax.random.split(key, 4)

    batch, n_inst, C, d_in, d_out, m = 8, 2, 3, 32, 32, 16

    original_A = jax.random.normal(k1, (n_inst, C, d_in, m), dtype=jnp.float32)
    original_B = jax.random.normal(k2, (n_inst, C, m, d_out), dtype=jnp.float32)
    x = jax.random.normal(k3, (batch, n_inst, d_out), dtype=jnp.float32)
    topk_mask = (jax.random.uniform(k4, (batch, n_inst, C)) > 0.5).astype(jnp.float32)

    # f32, no mask.
    out = jax.block_until_ready(transposed_linear_forward(x, original_A, original_B))
    ref = _reference_forward(x, original_A, original_B)
    assert out.shape == (batch, n_inst, d_in)
    assert jnp.allclose(out, ref, atol=2e-4, rtol=2e-4)

    # f32, masked.
    out_m = jax.block_until_ready(
        transposed_linear_forward(x, original_A, original_B, topk_mask))
    ref_m = _reference_forward(x, original_A, original_B, topk_mask)
    assert jnp.allclose(out_m, ref_m, atol=2e-4, rtol=2e-4)

    # bf16 weights stored persistently (cast ONCE outside the forward call,
    # not per-call inside the wrapper); accuracy checked vs. f32 reference.
    oa_bf = original_A.astype(jnp.bfloat16)
    ob_bf = original_B.astype(jnp.bfloat16)
    out_bf = jax.block_until_ready(
        transposed_linear_forward(x, oa_bf, ob_bf, topk_mask))
    assert out_bf.shape == (batch, n_inst, d_in)
    rel = jnp.linalg.norm((out_bf - ref_m).astype(jnp.float32)) / (
        jnp.linalg.norm(ref_m) + 1e-6)
    assert float(rel) < 3e-2, f"bf16 path relative error too large: {float(rel)}"

    print("KERNEL_OK")
</pallas_src>

<mosaic_0001>
module attributes {stable_mosaic.version = 11 : i64} {
  func.func @_tl_kernel_nomask(%arg0: i32, %arg1: i32, %arg2: memref<1x8x32xf32, #tpu.memory_space<vmem>>, %arg3: memref<1x48x32xf32, #tpu.memory_space<vmem>>, %arg4: memref<1x48x32xf32, #tpu.memory_space<vmem>>, %arg5: memref<1x8x32xf32, #tpu.memory_space<vmem>>) attributes {dimension_semantics = [#tpu.dimension_semantics<parallel>, #tpu.dimension_semantics<parallel>], iteration_bounds = array<i64: 2, 1>, scalar_prefetch = 0 : i64, scratch_operands = 0 : i64, tpu.core_type = #tpu.core_type<tc>, window_params = [{transform_indices = @transform_0, window_bounds = array<i64: 1, 8, 32>}, {transform_indices = @transform_1, window_bounds = array<i64: 1, 48, 32>}, {transform_indices = @transform_2, window_bounds = array<i64: 1, 48, 32>}, {transform_indices = @transform_3, window_bounds = array<i64: 1, 8, 32>}]} {
    %c0 = arith.constant 0 : index
    %c0_0 = arith.constant 0 : index
    %c0_1 = arith.constant 0 : index
    %0 = vector.load %arg2[%c0, %c0_0, %c0_1] : memref<1x8x32xf32, #tpu.memory_space<vmem>>, vector<1x8x32xf32>
    %1 = vector.shape_cast %0 : vector<1x8x32xf32> to vector<8x32xf32>
    %c0_2 = arith.constant 0 : index
    %c0_3 = arith.constant 0 : index
    %c0_4 = arith.constant 0 : index
    %2 = vector.load %arg3[%c0_2, %c0_3, %c0_4] : memref<1x48x32xf32, #tpu.memory_space<vmem>>, vector<1x48x32xf32>
    %3 = vector.shape_cast %2 : vector<1x48x32xf32> to vector<48x32xf32>
    %cst = arith.constant dense<0.000000e+00> : vector<8x48xf32>
    %4 = tpu.matmul %1, %3, %cst {dimension_numbers = #tpu.dot_dimension_numbers<[1], [1], [0], [0], [0, 0, 1, 0], [], []>} : vector<8x32xf32>, vector<48x32xf32>, vector<8x48xf32> -> vector<8x48xf32>
    %c0_5 = arith.constant 0 : index
    %c0_6 = arith.constant 0 : index
    %c0_7 = arith.constant 0 : index
    %5 = vector.load %arg4[%c0_5, %c0_6, %c0_7] : memref<1x48x32xf32, #tpu.memory_space<vmem>>, vector<1x48x32xf32>
    %6 = vector.shape_cast %5 : vector<1x48x32xf32> to vector<48x32xf32>
    %cst_8 = arith.constant dense<0.000000e+00> : vector<8x32xf32>
    %7 = tpu.matmul %4, %6, %cst_8 {dimension_numbers = #tpu.dot_dimension_numbers<[1], [0], [0], [1], [0, 0, 1, 1], [], []>} : vector<8x48xf32>, vector<48x32xf32>, vector<8x32xf32> -> vector<8x32xf32>
    %c0_9 = arith.constant 0 : index
    %c0_10 = arith.constant 0 : index
    %c0_11 = arith.constant 0 : index
    %8 = vector.load %arg5[%c0_9, %c0_10, %c0_11] : memref<1x8x32xf32, #tpu.memory_space<vmem>>, vector<1x8x32xf32>
    %9 = vector.shape_cast %8 : vector<1x8x32xf32> to vector<8x32xf32>
    %10 = vector.shape_cast %7 : vector<8x32xf32> to vector<1x8x32xf32>
    tpu.vector_store %arg5[%c0_9, %c0_10, %c0_11], %10 {strides = array<i32>} : memref<1x8x32xf32, #tpu.memory_space<vmem>>, vector<1x8x32xf32>,
    return
  }
  func.func @transform_0(%arg0: i32, %arg1: i32) -> (i32, i32, i32) {
    %c0_i32 = arith.constant 0 : i32
    %c0_i32_0 = arith.constant 0 : i32
    return %arg0, %arg1, %c0_i32 : i32, i32, i32
  }
  func.func @transform_1(%arg0: i32, %arg1: i32) -> (i32, i32, i32) {
    %c0_i32 = arith.constant 0 : i32
    %c0_i32_0 = arith.constant 0 : i32
    %c0_i32_1 = arith.constant 0 : i32
    return %arg0, %c0_i32, %c0_i32_0 : i32, i32, i32
  }
  func.func @transform_2(%arg0: i32, %arg1: i32) -> (i32, i32, i32) {
    %c0_i32 = arith.constant 0 : i32
    %c0_i32_0 = arith.constant 0 : i32
    %c0_i32_1 = arith.constant 0 : i32
    return %arg0, %c0_i32, %c0_i32_0 : i32, i32, i32
  }
  func.func @transform_3(%arg0: i32, %arg1: i32) -> (i32, i32, i32) {
    %c0_i32 = arith.constant 0 : i32
    %c0_i32_0 = arith.constant 0 : i32
    return %arg0, %arg1, %c0_i32 : i32, i32, i32
  }
}

</mosaic_0001>

<llo_original>
// kernel: tpu_custom_call.1
$region0: #{tpu_custom_call.1}
  #allocation0 [shape = 'u32[]', space=smem, size = 0x4, offset = 0x4, fixed_abs, tag = 'smem constant byte address 0x4 - core index']
  #allocation1 [shape = 'u32[72,128]{1,0:T(1,128)}', space=vmem, size = 0x9000, scoped, tag = 'internal scratch']
  %s0 = inlined_call_operand.vmem [shape: f32[2,8,32], index: 0, kind: input, shape index: {}]
  %s1 = inlined_call_operand.vmem [shape: f32[2,48,32], index: 1, kind: input, shape index: {}]
  %s2 = inlined_call_operand.vmem [shape: f32[2,48,32], index: 2, kind: input, shape index: {}]
  %s3 = inlined_call_operand.hbm [shape: f32[2,8,32], index: 3, kind: output, shape index: {}]
  %s4 = sld [smem:[#allocation0]]
  $region45: #{tpu_custom_call.1} parent=0
    _
  %s6 = ssub.s32 1, %s4
  %s7 = scalar_select 0, %s6, %s4
  $region1: #{tpu_custom_call.1} parent=0
    #allocation2 [shape = 'u8[8192]{0}', space=vmem, size = 0x2000, scoped, tag = 'output window, operand 0']
    #allocation3 [shape = 's32[2]{0}', space=sflag, size = 0x8, scoped, tag = 'scoped memory for tpu_custom_call.1']
    %8 = vsyncpa [#allocation3], 0
    %s9 = scalar_lea.sflag [#allocation3], 1
    %10 = vsyncpa %s9, 0
    loop: start=0, step=1, limit=4
    $region2: #{tpu_custom_call.1} parent=1 // loop_pre_header
      _
    $region3: #{tpu_custom_call.1} parent=1 // loop_header
      %s12 = sphi 0, %s16
      %p13 = scmp.ge.s32.totalorder %s12, 4
      %s19 = sphi 0, %s31
      %s20 = sphi 0, %s27
      %s21 = sphi 0, %s19
      %s22 = sphi 0, %s20
      %s23 = sphi 0, %s21
      %s24 = sphi 0, %s22
      %s36 = sphi 0, %s38
      %s39 = sphi 0, %s36
      %s40 = sphi 0, %s39
      %s56 = sphi 0, %s40
      %s62 = sphi 0, %s64
      %s65 = sphi 0, %s62
      %s66 = sphi 0, %s65
      %s82 = sphi 0, %s66
      %s88 = sphi 0, %s90
      %s91 = sphi 0, %s88
      %s92 = sphi 0, %s91
      %s108 = sphi 0, %s92
      %s116 = sphi 0, %s118
      %s119 = sphi 0, %s116
      %s120 = sphi 0, %s119
      %s136 = sphi 0, %s120
    $region4: #{tpu_custom_call.1} parent=1 // loop_header_branch
      %15 = sbr.rel (%p13) target = $region8
    $region5: #{tpu_custom_call.1} parent=1 // loop_body
      %s17 = ssub.s32 %s12, 1
      %s18 = ssub.s32 %s12, 2
      %s25 = sadd.s32 1, %s20
      %p26 = scmp.ge.s32.totalorder %s25, 1
      %s27 = scalar_select %p26, 0, %s25
      %s28 = sadd.s32 1, %s19
      %s29 = scalar_select %p26, %s28, %s19
      %p30 = scmp.ge.s32.totalorder %s29, 2
      %s31 = scalar_select %p30, 0, %s29
      %s32 = ssub.s32 %s19, %s31
      %s33 = ssub.s32 %s20, %s27
      %s34 = sor.u32 %s32, %s33
      %p35 = scmp.eq.s32.totalorder %s34, 0
      %s37 = sadd.s32 %s36, 1
      %s38 = scalar_select %p35, %s36, %s37
      %p41 = pneg %p35
      %p42 = scmp.eq.s32.totalorder %s12, 1
      %p43 = por %p41, %p42
      %p44 = scmp.ne.s32.totalorder %s36, %s39
      %p45 = scmp.eq.s32.totalorder %s12, 0
      %p46 = por %p44, %p45
      %p47 = scmp.ne.s32.totalorder %s36, %s39
      %p48 = scmp.eq.s32.totalorder %s17, 1
      %p49 = por %p47, %p48
      %p50 = scmp.ne.s32.totalorder %s39, %s40
      %p51 = scmp.eq.s32.totalorder %s17, 0
      %p52 = por %p50, %p51
      %p53 = scmp.ne.s32.totalorder %s39, %s40
      %p54 = scmp.eq.s32.totalorder %s18, 1
      %p55 = por %p53, %p54
      %p57 = scmp.ne.s32.totalorder %s40, %s56
      %p58 = scmp.eq.s32.totalorder %s18, 0
      %p59 = por %p57, %p58
      %s60 = ssub.s32 %s19, %s31
      %p61 = scmp.eq.s32.totalorder %s60, 0
      %s63 = sadd.s32 %s62, 1
      %s64 = scalar_select %p61, %s62, %s63
      %p67 = pneg %p61
      %p68 = scmp.eq.s32.totalorder %s12, 1
      %p69 = por %p67, %p68
      %p70 = scmp.ne.s32.totalorder %s62, %s65
      %p71 = scmp.eq.s32.totalorder %s12, 0
      %p72 = por %p70, %p71
      %p73 = scmp.ne.s32.totalorder %s62, %s65
      %p74 = scmp.eq.s32.totalorder %s17, 1
      %p75 = por %p73, %p74
      %p76 = scmp.ne.s32.totalorder %s65, %s66
      %p77 = scmp.eq.s32.totalorder %s17, 0
      %p78 = por %p76, %p77
      %p79 = scmp.ne.s32.totalorder %s65, %s66
      %p80 = scmp.eq.s32.totalorder %s18, 1
      %p81 = por %p79, %p80
      %p83 = scmp.ne.s32.totalorder %s66, %s82
      %p84 = scmp.eq.s32.totalorder %s18, 0
      %p85 = por %p83, %p84
      %s86 = ssub.s32 %s19, %s31
      %p87 = scmp.eq.s32.totalorder %s86, 0
      %s89 = sadd.s32 %s88, 1
      %s90 = scalar_select %p87, %s88, %s89
      %p93 = pneg %p87
      %p94 = scmp.eq.s32.totalorder %s12, 1
      %p95 = por %p93, %p94
      %p96 = scmp.ne.s32.totalorder %s88, %s91
      %p97 = scmp.eq.s32.totalorder %s12, 0
      %p98 = por %p96, %p97
      %p99 = scmp.ne.s32.totalorder %s88, %s91
      %p100 = scmp.eq.s32.totalorder %s17, 1
      %p101 = por %p99, %p100
      %p102 = scmp.ne.s32.totalorder %s91, %s92
      %p103 = scmp.eq.s32.totalorder %s17, 0
      %p104 = por %p102, %p103
      %p105 = scmp.ne.s32.totalorder %s91, %s92
      %p106 = scmp.eq.s32.totalorder %s18, 1
      %p107 = por %p105, %p106
      %p109 = scmp.ne.s32.totalorder %s92, %s108
      %p110 = scmp.eq.s32.totalorder %s18, 0
      %p111 = por %p109, %p110
      %s112 = ssub.s32 %s19, %s31
      %s113 = ssub.s32 %s20, %s27
      %s114 = sor.u32 %s112, %s113
      %p115 = scmp.eq.s32.totalorder %s114, 0
      %s117 = sadd.s32 %s116, 1
      %s118 = scalar_select %p115, %s116, %s117
      %p121 = pneg %p115
      %p122 = scmp.eq.s32.totalorder %s12, 1
      %p123 = por %p121, %p122
      %p124 = scmp.ne.s32.totalorder %s116, %s119
      %p125 = scmp.eq.s32.totalorder %s12, 0
      %p126 = por %p124, %p125
      %p127 = scmp.ne.s32.totalorder %s116, %s119
      %p128 = scmp.eq.s32.totalorder %s17, 1
      %p129 = por %p127, %p128
      %p130 = scmp.ne.s32.totalorder %s119, %s120
      %p131 = scmp.eq.s32.totalorder %s17, 0
      %p132 = por %p130, %p131
      %p133 = scmp.ne.s32.totalorder %s119, %s120
      %p134 = scmp.eq.s32.totalorder %s18, 1
      %p135 = por %p133, %p134
      %p137 = scmp.ne.s32.totalorder %s120, %s136
      %p138 = scmp.eq.s32.totalorder %s18, 0
      %p139 = por %p137, %p138
      %p140 = scmp.le.s32.totalorder 1, %s12
      %p141 = scmp.lt.s32.totalorder %s12, 3
      %p142 = pnand %p140, %p141
      %p143 = pneg %p142
      // Predicated region
      $region9: #{tpu_custom_call.1} parent=5 // pred_check
        _
      $region10: #{tpu_custom_call.1} parent=5 // pred_check_branch
        %145 = sbr.rel (%p142) target = $region12
      $region11: #{tpu_custom_call.1} parent=5 // pred_region
        %s146 = ssub.s32 %s12, 1
      $region12: #{tpu_custom_call.1} parent=5 // pred_fallthru
        _
      %p147 = scmp.lt.s32.totalorder %s12, 2
      // Predicated region
      $region13: #{tpu_custom_call.1} parent=5 // pred_check
        %p148 = pneg %p147
      $region14: #{tpu_custom_call.1} parent=5 // pred_check_branch
        %150 = sbr.rel (%p148) target = $region16
      $region15: #{tpu_custom_call.1} parent=5 // pred_region
        // Predicated region
        $region17: #{tpu_custom_call.1} parent=15 // pred_check
          %p151 = pneg %p46
        $region18: #{tpu_custom_call.1} parent=15 // pred_check_branch
          %153 = sbr.rel (%p151) target = $region20
        $region19: #{tpu_custom_call.1} parent=15 // pred_region
          %p154 = scmp.lt.s32.totalorder %s19, 1
          %s155 = scalar_select %p154, %s19, 1
          %p156 = scmp.lt.s32.totalorder %s20, 0
          %s157 = scalar_select %p156, %s20, 0
          %s158 = sadd.s32 %s157, %s155
          %s159 = smul.addr %s158, 8
          %s160 = scalar_lea.vmem %s0, %s159
        $region20: #{tpu_custom_call.1} parent=15 // pred_fallthru
          _
        // Predicated region
        $region21: #{tpu_custom_call.1} parent=15 // pred_check
          %p161 = pneg %p72
        $region22: #{tpu_custom_call.1} parent=15 // pred_check_branch
          %163 = sbr.rel (%p161) target = $region24
        $region23: #{tpu_custom_call.1} parent=15 // pred_region
          %p164 = scmp.lt.s32.totalorder %s19, 1
          %s165 = scalar_select %p164, %s19, 1
          %s166 = smul.addr %s165, 6
          %s167 = smul.addr %s166, 8
          %s168 = scalar_lea.vmem %s1, %s167
        $region24: #{tpu_custom_call.1} parent=15 // pred_fallthru
          _
        // Predicated region
        $region25: #{tpu_custom_call.1} parent=15 // pred_check
          %p169 = pneg %p98
        $region26: #{tpu_custom_call.1} parent=15 // pred_check_branch
          %171 = sbr.rel (%p169) target = $region28
        $region27: #{tpu_custom_call.1} parent=15 // pred_region
          %p172 = scmp.lt.s32.totalorder %s19, 1
          %s173 = scalar_select %p172, %s19, 1
          %s174 = smul.addr %s173, 6
          %s175 = smul.addr %s174, 8
          %s176 = scalar_lea.vmem %s2, %s175
        $region28: #{tpu_custom_call.1} parent=15 // pred_fallthru
          _
      $region16: #{tpu_custom_call.1} parent=5 // pred_fallthru
        _
      %p177 = scmp.le.s32.totalorder 1, %s12
      %p178 = scmp.lt.s32.totalorder %s12, 3
      %p179 = pnand %p177, %p178
      %p180 = pneg %p179
      // Predicated region
      $region29: #{tpu_custom_call.1} parent=5 // pred_check
        _
      $region30: #{tpu_custom_call.1} parent=5 // pred_check_branch
        %182 = sbr.rel (%p179) target = $region32
      $region31: #{tpu_custom_call.1} parent=5 // pred_region
        %s183 = ssub.s32 %s12, 1
        %p184 = scmp.lt.s32.totalorder %s21, 1
        %s185 = scalar_select %p184, %s21, 1
        %p186 = scmp.lt.s32.totalorder %s22, 0
        %s187 = scalar_select %p186, %s22, 0
        %s188 = sadd.s32 %s187, %s185
        %s189 = smul.addr %s188, 8
        %s190 = scalar_lea.vmem %s0, %s189
        %p191 = pneg %p52
        %p192 = pneg %p49
        %p193 = scmp.lt.s32.totalorder %s21, 1
        %s194 = scalar_select %p193, %s21, 1
        %s195 = smul.addr %s194, 6
        %s196 = smul.addr %s195, 8
        %s197 = scalar_lea.vmem %s1, %s196
        %p198 = pneg %p78
        %p199 = pneg %p75
        %p200 = scmp.lt.s32.totalorder %s21, 1
        %s201 = scalar_select %p200, %s21, 1
        %s202 = smul.addr %s201, 6
        %s203 = smul.addr %s202, 8
        %s204 = scalar_lea.vmem %s2, %s203
        %p205 = pneg %p104
        %p206 = pneg %p101
        %p207 = pneg %p132
        %p208 = pneg %p129
        %s209 = sand.u32 %s119, 1
        %s210 = scalar_lea.sflag [#allocation3], %s209
        %s211 = sand.u32 %s119, 1
        %s212 = smul.addr %s211, 8
        %s213 = scalar_lea.vmem [#allocation2], %s212
        %p214 = scmp.lt.s32.totalorder %s21, 1
        %s215 = scalar_select %p214, %s21, 1
        %p216 = scmp.lt.s32.totalorder %s22, 0
        %s217 = scalar_select %p216, %s22, 0
        %s218 = sadd.s32 %s217, %s215
        %s219 = smul.addr %s218, 8
        %s220 = scalar_lea.vmem %s0, %s219
        %p221 = scmp.lt.s32.totalorder %s21, 1
        %s222 = scalar_select %p221, %s21, 1
        %s223 = smul.addr %s222, 6
        %s224 = smul.addr %s223, 8
        %s225 = scalar_lea.vmem %s1, %s224
        %p226 = scmp.lt.s32.totalorder %s21, 1
        %s227 = scalar_select %p226, %s21, 1
        %s228 = smul.addr %s227, 6
        %s229 = smul.addr %s228, 8
        %s230 = scalar_lea.vmem %s2, %s229
        %v231 = vld [vmem:[%s220] sm:$0xff]
        %v232 = vld [vmem:[%s225] sm:$0xff]
        %v233 = vld [vmem:[%s225 + $0x8] sm:$0xff]
        %v234 = vld [vmem:[%s225 + $0x10] sm:$0xff]
        %v235 = vld [vmem:[%s225 + $0x18] sm:$0xff]
        %v236 = vld [vmem:[%s225 + $0x20] sm:$0xff]
        %v237 = vld [vmem:[%s225 + $0x28] sm:$0xff]
        %vm238 = vcmask 261120
        %v240 = vsel %vm238, %v231, 0
        %v243 = vsel %vm238, %v232, 0
        %v246 = vsel %vm238, %v233, 0
        %v249 = vsel %vm238, %v234, 0
        %v252 = vsel %vm238, %v235, 0
        %v255 = vsel %vm238, %v236, 0
        %v258 = vsel %vm238, %v237, 0
        %260 = vmatpush.xpose.msra.mxu0 0.0
        %261 = vmatpush.xpose.msra.mxu0 0.0
        %262 = vmatpush.xpose.msra.mxu0 0.0
        %263 = vmatpush.xpose.msra.mxu0 0.0
        %264 = vmatpush.xpose.msra.mxu0 0.0
        %265 = vmatpush.xpose.msra.mxu0 0.0
        %266 = vmatpush.xpose.msra.mxu0 0.0
        %267 = vmatpush.xpose.msra.mxu0 0.0
        %268 = vmatpush.xpose.msra.mxu0 0.0
        %269 = vmatpush.xpose.msra.mxu0 0.0
        %270 = vmatpush.xpose.msra.mxu0 %v258
        %271 = vmatpush.xpose.msra.mxu0 %v255
        %272 = vmatpush.xpose.msra.mxu0 %v252
        %273 = vmatpush.xpose.msra.mxu0 %v249
        %274 = vmatpush.xpose.msra.mxu0 %v246
        %275 = vmatpush.xpose.msra.mxu0 %v243
        %276 = vmatmul.f32.gmra.mxu0 %v240
        %v277 = vpop.f32.mrf.mxu0
        %v278 = vadd.f32 0.0, %v277
        %279 = vdwg.mxu0
        %v280 = vld [vmem:[%s230] sm:$0xff]
        %v281 = vld [vmem:[%s230 + $0x8] sm:$0xff]
        %v282 = vld [vmem:[%s230 + $0x10] sm:$0xff]
        %v283 = vld [vmem:[%s230 + $0x18] sm:$0xff]
        %v284 = vld [vmem:[%s230 + $0x20] sm:$0xff]
        %v285 = vld [vmem:[%s230 + $0x28] sm:$0xff]
        %vm286 = vcmask 392192
        %v288 = vsel %vm286, %v278, 0
        %290 = vmatpush.msra.mxu0 0.0
        %291 = vmatpush.msra.mxu0 0.0
        %292 = vmatpush.msra.mxu0 0.0
        %293 = vmatpush.msra.mxu0 0.0
        %294 = vmatpush.msra.mxu0 0.0
        %295 = vmatpush.msra.mxu0 0.0
        %296 = vmatpush.msra.mxu0 0.0
        %297 = vmatpush.msra.mxu0 0.0
        %298 = vmatpush.msra.mxu0 0.0
        %299 = vmatpush.msra.mxu0 0.0
        %300 = vmatpush.msra.mxu0 %v285
        %301 = vmatpush.msra.mxu0 %v284
        %302 = vmatpush.msra.mxu0 %v283
        %303 = vmatpush.msra.mxu0 %v282
        %304 = vmatpush.msra.mxu0 %v281
        %305 = vmatpush.msra.mxu0 %v280
        %306 = vmatmul.f32.gmra.mxu0 %v288
        %v307 = vpop.f32.mrf.mxu0
        %v308 = vadd.f32 0.0, %v307
        %309 = vdwg.mxu0
        %310 = vst.msk [vmem:[%s213] sm:$0xff] %vm238, %v308
        %s311 = sand.u32 %s119, 1
        %s312 = scalar_lea.sflag [#allocation3], %s311
        %s313 = sand.u32 %s119, 1
        %s314 = smul.addr %s313, 8
        %s315 = scalar_lea.vmem [#allocation2], %s314
        // Predicated region
        $region33: #{tpu_custom_call.1} parent=31 // pred_check
          %p316 = pneg %p129
        $region34: #{tpu_custom_call.1} parent=31 // pred_check_branch
          %318 = sbr.rel (%p316) target = $region36
        $region35: #{tpu_custom_call.1} parent=31 // pred_region
          %320 = vsyncadd %s312, 0
          %s321 = sadd.s32 %s22, %s21
          %s322 = smul.addr %s321, 8
          %s323 = scalar_lea.hbm %s3, %s322
          %s325 = sshll.u32 %s315, 4
          %s326 = int_to_ptr.vmem [resolvable:$true] %s325
          %s327 = sshll.u32 %s323, 4
          %s328 = int_to_ptr.hbm [resolvable:$true] %s327
          %330 = dma.vmem_to_hbm [thread:$0]  %s326, 128, %s328, %s312
        $region36: #{tpu_custom_call.1} parent=31 // pred_fallthru
          _
      $region32: #{tpu_custom_call.1} parent=5 // pred_fallthru
        _
      %p331 = scmp.le.s32.totalorder 2, %s12
      // Predicated region
      $region37: #{tpu_custom_call.1} parent=5 // pred_check
        %p332 = pneg %p331
      $region38: #{tpu_custom_call.1} parent=5 // pred_check_branch
        %334 = sbr.rel (%p332) target = $region40
      $region39: #{tpu_custom_call.1} parent=5 // pred_region
        %s335 = ssub.s32 %s12, 2
        // Predicated region
        $region41: #{tpu_custom_call.1} parent=39 // pred_check
          %p336 = pneg %p135
        $region42: #{tpu_custom_call.1} parent=39 // pred_check_branch
          %338 = sbr.rel (%p336) target = $region44
        $region43: #{tpu_custom_call.1} parent=39 // pred_region
          %s339 = sand.u32 %s120, 1
          %s340 = scalar_lea.sflag [#allocation3], %s339
          %s341 = sand.u32 %s120, 1
          %s342 = smul.addr %s341, 8
          %s343 = scalar_lea.vmem [#allocation2], %s342
          %345 = dma.done %s340, 128
        $region44: #{tpu_custom_call.1} parent=39 // pred_fallthru
          _
      $region40: #{tpu_custom_call.1} parent=5 // pred_fallthru
        _
    $region6: #{tpu_custom_call.1} parent=1 // loop_footer
      %s16 = sadd.s32 1, %s12
    $region7: #{tpu_custom_call.1} parent=1 // loop_footer_branch
      %11 = sbr.rel target = $region3
    $region8: #{tpu_custom_call.1} parent=1 // loop_exit
      _
    %346 = vsyncpa [#allocation3], 1
    %s347 = scalar_lea.sflag [#allocation3], 1
    %348 = vsyncpa %s347, 1

</llo_original>
